<compile_context>
chip_gen: v7x
topology: tpu7x:2x2x1
jax: 0.10.0
libtpu: 0.0.40
codegen_flags: <defaults>
</compile_context>

<pallas_src>
import functools
import math

import jax
import jax.numpy as jnp
from jax.experimental import pallas as pl
from jax.experimental.pallas import tpu as pltpu

SUBLANE = 8
_MiB = 1 << 20


def _round_up(n, m):
    return ((n + m - 1) // m) * m


def _fused_mlp_kernel(x_ref, *refs, activations):
    """Fused multi-layer MLP on one batch tile.

    x_ref : (TILE_B, IN0)
    refs  : (w0, b0, w1, b1, ..., w_{L-1}, b_{L-1}, o_ref)
        w_i   : (INi, OUTi)  pre-transposed
        b_i   : (1, OUTi)
        o_ref : (TILE_B, OUT_{L-1})
    """
    n_layers = len(activations)
    o_ref = refs[2 * n_layers]
    h = x_ref[...].astype(jnp.float32)
    for i, act in enumerate(activations):
        w = refs[2 * i][...]
        b = refs[2 * i + 1][...]
        if w.dtype != h.dtype:
            # bf16-parameter path: feed the MXU bf16 operands, accumulate in f32.
            h = h.astype(w.dtype)
        h = jnp.dot(h, w, preferred_element_type=jnp.float32) + b.astype(jnp.float32)
        if act == "relu":
            h = jnp.maximum(h, 0.0)
        elif act == "tanh":
            h = jnp.tanh(h)
        # 'none' / unknown activation -> fallthrough (matches the PyTorch else branch).
        # TODO(synk): 'softmax' in the original calls torch.softmax without a dim
        # (a runtime error in PyTorch), so it is not implemented here.
    o_ref[...] = h.astype(o_ref.dtype)


def _build_call(batch, in_f, out_f, tile_b, weights, biases, activations,
                weight_buffered):
    """Build the pallas_call callable for the fused MLP."""
    grid = (pl.cdiv(batch, tile_b),)

    # x: batch-tiled; last dim is full-extent (no 128-lane padding needed).
    in_specs = [pl.BlockSpec((tile_b, in_f), lambda i: (i, 0))]
    for w, b in zip(weights, biases):
        if weight_buffered:
            # Constant block index -> resident in VMEM; single buffer (no point
            # double-buffering something that is never re-fetched).
            w_spec = pl.BlockSpec(w.shape, lambda i: (0, 0), pipeline_mode=pl.Buffered(1))
            b_spec = pl.BlockSpec(b.shape, lambda i: (0, 0), pipeline_mode=pl.Buffered(1))
        else:
            w_spec = pl.BlockSpec(w.shape, lambda i: (0, 0))
            b_spec = pl.BlockSpec(b.shape, lambda i: (0, 0))
        in_specs.append(w_spec)
        in_specs.append(b_spec)

    out_spec = pl.BlockSpec((tile_b, out_f), lambda i: (i, 0))

    # ---- cost estimate + VMEM budget -------------------------------------
    param_bytes = sum(int(w.size) * w.dtype.itemsize + int(b.size) * b.dtype.itemsize
                      for w, b in zip(weights, biases))
    flops = 0
    transcendentals = 0
    for w, act in zip(weights, activations):
        k, n = w.shape
        flops += 2 * batch * k * n + batch * n          # matmul + bias add
        if act == "tanh":
            transcendentals += batch * n
    bytes_accessed = (batch * in_f + batch * out_f) * 4 + param_bytes
    cost = pl.CostEstimate(flops=flops, transcendentals=transcendentals,
                           bytes_accessed=bytes_accessed)

    widths = [in_f] + [int(w.shape[1]) for w in weights]
    act_bytes = 2 * tile_b * in_f * 4 + 2 * tile_b * out_f * 4   # double-buffered I/O tiles
    act_bytes += 2 * tile_b * max(widths) * 4                    # in-flight h temporaries
    wbuf = 1 if weight_buffered else 2
    vmem_est = wbuf * param_bytes + act_bytes
    # Never below the 32 MiB default; stay under v7x's 64 MiB physical VMEM.
    vmem_limit = int(min(max(2 * vmem_est, 32 * _MiB), 56 * _MiB))
    # TODO(synk): no N-tiling fallback when resident weights exceed ~half of v7x's
    # 64 MiB VMEM; very wide layers_info configs would need an extra grid axis over
    # the widest layer's out-features.

    kernel = functools.partial(_fused_mlp_kernel, activations=tuple(activations))
    return pl.pallas_call(
        kernel,
        out_shape=jax.ShapeDtypeStruct((batch, out_f), jnp.float32),
        grid_spec=pl.GridSpec(grid=grid, in_specs=in_specs, out_specs=out_spec),
        compiler_params=pltpu.CompilerParams(
            # Batch tiles are independent -> shard across TensorCores on v7x.
            dimension_semantics=("parallel",),
            vmem_limit_bytes=vmem_limit,
        ),
        cost_estimate=cost,
    )


def fused_mlp(x, weights, biases, activations, tile_b):
    """Run the whole MLP in one pallas_call over a batch grid (no padding anywhere)."""
    batch, in_f = x.shape
    out_f = int(weights[-1].shape[1])
    args = [x]
    for w, b in zip(weights, biases):
        args.append(w)
        args.append(b)
    try:
        out = _build_call(batch, in_f, out_f, tile_b, weights, biases,
                          activations, weight_buffered=True)(*args)
        return jax.block_until_ready(out)   # surface any lowering issue here
    except Exception:
        # Fallback if single-buffered resident inputs (pl.Buffered(1)) are not
        # supported by this jax build: default double-buffering (2x weight VMEM).
        out = _build_call(batch, in_f, out_f, tile_b, weights, biases,
                          activations, weight_buffered=False)(*args)
        return out


class CustomNeuralNetworkPallas:
    """JAX/Pallas equivalent of CustomNeuralNetwork.forward (inference only).

    Only the forward pass is implemented; the optimizer / history / plotting code
    in the PyTorch class is training-side bookkeeping with no kernel content.
    """

    def __init__(self, layers_info, seed=0, tile_b=512, param_dtype=jnp.float32):
        self.layers_info = layers_info
        self.tile_b = int(tile_b)
        self.activations = []
        self.w_orig = []   # (out_f, in_f)  -- PyTorch nn.Linear convention (reference)
        self.b_orig = []   # (out_f,)
        self.w_t = []      # (in_f, out_f)  -- pre-transposed, unpadded (kernel)
        self.b_row = []    # (1, out_f)

        key = jax.random.PRNGKey(seed)
        for layer_info in layers_info:
            assert layer_info["type"] == "linear"
            in_f = layer_info["input_size"]
            out_f = layer_info["output_size"]
            key, wk, bk = jax.random.split(key, 3)
            # Matches `layer.weight.data.normal_(0, 0.1)` in the reference.
            w = 0.1 * jax.random.normal(wk, (out_f, in_f), dtype=jnp.float32)
            # PyTorch default bias init: U(-1/sqrt(in), 1/sqrt(in)).
            bound = 1.0 / math.sqrt(in_f)
            b = jax.random.uniform(
                bk, (out_f,), dtype=jnp.float32, minval=-bound, maxval=bound
            )
            self.w_orig.append(w)
            self.b_orig.append(b)
            self.w_t.append(jnp.asarray(w.T, dtype=param_dtype))
            self.b_row.append(jnp.asarray(b.reshape(1, out_f), dtype=param_dtype))
            self.activations.append(layer_info["activation"])

        self.in_f0 = layers_info[0]["input_size"]
        self.out_f_last = layers_info[-1]["output_size"]

    def forward(self, x):
        x = jnp.asarray(x, dtype=jnp.float32)
        batch, in_f = x.shape
        assert in_f == self.in_f0
        # Batch tile: multiple of the 8-row sublane (or the full batch when tiny),
        # capped at self.tile_b; for batch >= 16 guarantee >= 2 grid steps so both
        # TensorCores on v7x get work.
        if batch <= SUBLANE:
            tile_b = batch
        else:
            tile_b = min(self.tile_b, _round_up(batch, SUBLANE))
            if batch >= 2 * SUBLANE:
                tile_b = min(tile_b, _round_up(pl.cdiv(batch, 2), SUBLANE))
        return fused_mlp(x, self.w_t, self.b_row, self.activations, tile_b)

    def reference(self, x):
        """Plain-JAX f32 reference for correctness checking."""
        x = jnp.asarray(x, dtype=jnp.float32)
        for w, b, act in zip(self.w_orig, self.b_orig, self.activations):
            x = x @ w.T + b
            if act == "relu":
                x = jnp.maximum(x, 0.0)
            elif act == "tanh":
                x = jnp.tanh(x)
        return x


if __name__ == "__main__":
    # Small MLP consistent with the module's layers_info schema.
    layers_info = [
        {"type": "linear", "input_size": 32, "output_size": 64, "activation": "relu"},
        {"type": "linear", "input_size": 64, "output_size": 64, "activation": "tanh"},
        {"type": "linear", "input_size": 64, "output_size": 16, "activation": "none"},
    ]

    net = CustomNeuralNetworkPallas(layers_info, seed=0)

    key = jax.random.PRNGKey(0)
    x = jax.random.normal(key, (8, 32), dtype=jnp.float32)

    out = jax.block_until_ready(net.forward(x))
    ref = net.reference(x)
    assert out.shape == (8, 16), out.shape
    assert jnp.allclose(out, ref, atol=1e-5, rtol=1e-5)

    # Multi-step, non-divisible batch: exercises the masked tail block (no batch padding).
    x_big = jax.random.normal(jax.random.PRNGKey(1), (37, 32), dtype=jnp.float32)
    out_big = jax.block_until_ready(net.forward(x_big))
    assert out_big.shape == (37, 16), out_big.shape
    assert jnp.allclose(out_big, net.reference(x_big), atol=1e-5, rtol=1e-5)

    # Optional bf16-parameter path (native bf16 MXU, half the weight VMEM/DMA bytes).
    net_bf16 = CustomNeuralNetworkPallas(layers_info, seed=0, param_dtype=jnp.bfloat16)
    out_bf16 = jax.block_until_ready(net_bf16.forward(x))
    assert out_bf16.shape == (8, 16)
    assert float(jnp.max(jnp.abs(out_bf16 - ref))) < 5e-2

    print("KERNEL_OK")
</pallas_src>

<mosaic_0001>
module attributes {stable_mosaic.version = 11 : i64} {
  func.func @_fused_mlp_kernel(%arg0: i32, %arg1: memref<8x32xf32, #tpu.memory_space<vmem>>, %arg2: memref<32x64xf32, #tpu.memory_space<vmem>>, %arg3: memref<1x64xf32, #tpu.memory_space<vmem>>, %arg4: memref<64x64xf32, #tpu.memory_space<vmem>>, %arg5: memref<1x64xf32, #tpu.memory_space<vmem>>, %arg6: memref<64x16xf32, #tpu.memory_space<vmem>>, %arg7: memref<1x16xf32, #tpu.memory_space<vmem>>, %arg8: memref<8x16xf32, #tpu.memory_space<vmem>>) attributes {dimension_semantics = [#tpu.dimension_semantics<parallel>], iteration_bounds = array<i64: 1>, scalar_prefetch = 0 : i64, scratch_operands = 0 : i64, tpu.core_type = #tpu.core_type<tc>, window_params = [{transform_indices = @transform_0, window_bounds = array<i64: 8, 32>}, {pipeline_mode = #tpu.pipeline_mode<synchronous>, transform_indices = @transform_1, window_bounds = array<i64: 32, 64>}, {pipeline_mode = #tpu.pipeline_mode<synchronous>, transform_indices = @transform_2, window_bounds = array<i64: 1, 64>}, {pipeline_mode = #tpu.pipeline_mode<synchronous>, transform_indices = @transform_3, window_bounds = array<i64: 64, 64>}, {pipeline_mode = #tpu.pipeline_mode<synchronous>, transform_indices = @transform_4, window_bounds = array<i64: 1, 64>}, {pipeline_mode = #tpu.pipeline_mode<synchronous>, transform_indices = @transform_5, window_bounds = array<i64: 64, 16>}, {pipeline_mode = #tpu.pipeline_mode<synchronous>, transform_indices = @transform_6, window_bounds = array<i64: 1, 16>}, {transform_indices = @transform_7, window_bounds = array<i64: 8, 16>}]} {
    %c0 = arith.constant 0 : index
    %c0_0 = arith.constant 0 : index
    %0 = vector.load %arg1[%c0, %c0_0] : memref<8x32xf32, #tpu.memory_space<vmem>>, vector<8x32xf32>
    %c0_1 = arith.constant 0 : index
    %c0_2 = arith.constant 0 : index
    %1 = vector.load %arg2[%c0_1, %c0_2] : memref<32x64xf32, #tpu.memory_space<vmem>>, vector<32x64xf32>
    %c0_3 = arith.constant 0 : index
    %c0_4 = arith.constant 0 : index
    %2 = vector.load %arg3[%c0_3, %c0_4] : memref<1x64xf32, #tpu.memory_space<vmem>>, vector<1x64xf32>
    %cst = arith.constant dense<0.000000e+00> : vector<8x64xf32>
    %3 = tpu.matmul %0, %1, %cst {dimension_numbers = #tpu.dot_dimension_numbers<[1], [0], [0], [1], [0, 0, 1, 1], [], []>} : vector<8x32xf32>, vector<32x64xf32>, vector<8x64xf32> -> vector<8x64xf32>
    %4 = vector.broadcast %2 : vector<1x64xf32> to vector<8x64xf32>
    %5 = arith.addf %3, %4 : vector<8x64xf32>
    %cst_5 = arith.constant 0.000000e+00 : f32
    %6 = vector.broadcast %cst_5 : f32 to vector<8x64xf32>
    %7 = arith.maximumf %5, %6 : vector<8x64xf32>
    %c0_6 = arith.constant 0 : index
    %c0_7 = arith.constant 0 : index
    %8 = vector.load %arg4[%c0_6, %c0_7] : memref<64x64xf32, #tpu.memory_space<vmem>>, vector<64x64xf32>
    %c0_8 = arith.constant 0 : index
    %c0_9 = arith.constant 0 : index
    %9 = vector.load %arg5[%c0_8, %c0_9] : memref<1x64xf32, #tpu.memory_space<vmem>>, vector<1x64xf32>
    %cst_10 = arith.constant dense<0.000000e+00> : vector<8x64xf32>
    %10 = tpu.matmul %7, %8, %cst_10 {dimension_numbers = #tpu.dot_dimension_numbers<[1], [0], [0], [1], [0, 0, 1, 1], [], []>} : vector<8x64xf32>, vector<64x64xf32>, vector<8x64xf32> -> vector<8x64xf32>
    %11 = vector.broadcast %9 : vector<1x64xf32> to vector<8x64xf32>
    %12 = arith.addf %10, %11 : vector<8x64xf32>
    %13 = math.tanh %12 : vector<8x64xf32>
    %c0_11 = arith.constant 0 : index
    %c0_12 = arith.constant 0 : index
    %14 = vector.load %arg6[%c0_11, %c0_12] : memref<64x16xf32, #tpu.memory_space<vmem>>, vector<64x16xf32>
    %c0_13 = arith.constant 0 : index
    %c0_14 = arith.constant 0 : index
    %15 = vector.load %arg7[%c0_13, %c0_14] : memref<1x16xf32, #tpu.memory_space<vmem>>, vector<1x16xf32>
    %cst_15 = arith.constant dense<0.000000e+00> : vector<8x16xf32>
    %16 = tpu.matmul %13, %14, %cst_15 {dimension_numbers = #tpu.dot_dimension_numbers<[1], [0], [0], [1], [0, 0, 1, 1], [], []>} : vector<8x64xf32>, vector<64x16xf32>, vector<8x16xf32> -> vector<8x16xf32>
    %17 = vector.broadcast %15 : vector<1x16xf32> to vector<8x16xf32>
    %18 = arith.addf %16, %17 : vector<8x16xf32>
    %c0_16 = arith.constant 0 : index
    %c0_17 = arith.constant 0 : index
    %19 = vector.load %arg8[%c0_16, %c0_17] : memref<8x16xf32, #tpu.memory_space<vmem>>, vector<8x16xf32>
    tpu.vector_store %arg8[%c0_16, %c0_17], %18 {strides = array<i32>} : memref<8x16xf32, #tpu.memory_space<vmem>>, vector<8x16xf32>,
    return
  }
  func.func @transform_0(%arg0: i32) -> (i32, i32) {
    %c0_i32 = arith.constant 0 : i32
    %c0_i32_0 = arith.constant 0 : i32
    return %arg0, %c0_i32 : i32, i32
  }
  func.func @transform_1(%arg0: i32) -> (i32, i32) {
    %c0_i32 = arith.constant 0 : i32
    %c0_i32_0 = arith.constant 0 : i32
    %c0_i32_1 = arith.constant 0 : i32
    return %c0_i32, %c0_i32_0 : i32, i32
  }
  func.func @transform_2(%arg0: i32) -> (i32, i32) {
    %c0_i32 = arith.constant 0 : i32
    %c0_i32_0 = arith.constant 0 : i32
    %c0_i32_1 = arith.constant 0 : i32
    return %c0_i32, %c0_i32_0 : i32, i32
  }
  func.func @transform_3(%arg0: i32) -> (i32, i32) {
    %c0_i32 = arith.constant 0 : i32
    %c0_i32_0 = arith.constant 0 : i32
    %c0_i32_1 = arith.constant 0 : i32
    return %c0_i32, %c0_i32_0 : i32, i32
  }
  func.func @transform_4(%arg0: i32) -> (i32, i32) {
    %c0_i32 = arith.constant 0 : i32
    %c0_i32_0 = arith.constant 0 : i32
    %c0_i32_1 = arith.constant 0 : i32
    return %c0_i32, %c0_i32_0 : i32, i32
  }
  func.func @transform_5(%arg0: i32) -> (i32, i32) {
    %c0_i32 = arith.constant 0 : i32
    %c0_i32_0 = arith.constant 0 : i32
    %c0_i32_1 = arith.constant 0 : i32
    return %c0_i32, %c0_i32_0 : i32, i32
  }
  func.func @transform_6(%arg0: i32) -> (i32, i32) {
    %c0_i32 = arith.constant 0 : i32
    %c0_i32_0 = arith.constant 0 : i32
    %c0_i32_1 = arith.constant 0 : i32
    return %c0_i32, %c0_i32_0 : i32, i32
  }
  func.func @transform_7(%arg0: i32) -> (i32, i32) {
    %c0_i32 = arith.constant 0 : i32
    %c0_i32_0 = arith.constant 0 : i32
    return %arg0, %c0_i32 : i32, i32
  }
}

module attributes {stable_mosaic.version = 11 : i64} {
  func.func @_fused_mlp_kernel(%arg0: i32, %arg1: memref<8x32xf32, #tpu.memory_space<vmem>>, %arg2: memref<32x64xf32, #tpu.memory_space<vmem>>, %arg3: memref<1x64xf32, #tpu.memory_space<vmem>>, %arg4: memref<64x64xf32, #tpu.memory_space<vmem>>, %arg5: memref<1x64xf32, #tpu.memory_space<vmem>>, %arg6: memref<64x16xf32, #tpu.memory_space<vmem>>, %arg7: memref<1x16xf32, #tpu.memory_space<vmem>>, %arg8: memref<8x16xf32, #tpu.memory_space<vmem>>) attributes {dimension_semantics = [#tpu.dimension_semantics<parallel>], iteration_bounds = array<i64: 1>, scalar_prefetch = 0 : i64, scratch_operands = 0 : i64, tpu.core_type = #tpu.core_type<tc>, window_params = [{transform_indices = @transform_0, window_bounds = array<i64: 8, 32>}, {pipeline_mode = #tpu.pipeline_mode<synchronous>, transform_indices = @transform_1, window_bounds = array<i64: 32, 64>}, {pipeline_mode = #tpu.pipeline_mode<synchronous>, transform_indices = @transform_2, window_bounds = array<i64: 1, 64>}, {pipeline_mode = #tpu.pipeline_mode<synchronous>, transform_indices = @transform_3, window_bounds = array<i64: 64, 64>}, {pipeline_mode = #tpu.pipeline_mode<synchronous>, transform_indices = @transform_4, window_bounds = array<i64: 1, 64>}, {pipeline_mode = #tpu.pipeline_mode<synchronous>, transform_indices = @transform_5, window_bounds = array<i64: 64, 16>}, {pipeline_mode = #tpu.pipeline_mode<synchronous>, transform_indices = @transform_6, window_bounds = array<i64: 1, 16>}, {transform_indices = @transform_7, window_bounds = array<i64: 8, 16>}]} {
    %c0 = arith.constant 0 : index
    %c0_0 = arith.constant 0 : index
    %0 = vector.load %arg1[%c0, %c0_0] : memref<8x32xf32, #tpu.memory_space<vmem>>, vector<8x32xf32>
    %c0_1 = arith.constant 0 : index
    %c0_2 = arith.constant 0 : index
    %1 = vector.load %arg2[%c0_1, %c0_2] : memref<32x64xf32, #tpu.memory_space<vmem>>, vector<32x64xf32>
    %c0_3 = arith.constant 0 : index
    %c0_4 = arith.constant 0 : index
    %2 = vector.load %arg3[%c0_3, %c0_4] : memref<1x64xf32, #tpu.memory_space<vmem>>, vector<1x64xf32>
    %cst = arith.constant dense<0.000000e+00> : vector<8x64xf32>
    %3 = tpu.matmul %0, %1, %cst {dimension_numbers = #tpu.dot_dimension_numbers<[1], [0], [0], [1], [0, 0, 1, 1], [], []>} : vector<8x32xf32>, vector<32x64xf32>, vector<8x64xf32> -> vector<8x64xf32>
    %4 = vector.broadcast %2 : vector<1x64xf32> to vector<8x64xf32>
    %5 = arith.addf %3, %4 : vector<8x64xf32>
    %cst_5 = arith.constant 0.000000e+00 : f32
    %6 = vector.broadcast %cst_5 : f32 to vector<8x64xf32>
    %7 = arith.maximumf %5, %6 : vector<8x64xf32>
    %c0_6 = arith.constant 0 : index
    %c0_7 = arith.constant 0 : index
    %8 = vector.load %arg4[%c0_6, %c0_7] : memref<64x64xf32, #tpu.memory_space<vmem>>, vector<64x64xf32>
    %c0_8 = arith.constant 0 : index
    %c0_9 = arith.constant 0 : index
    %9 = vector.load %arg5[%c0_8, %c0_9] : memref<1x64xf32, #tpu.memory_space<vmem>>, vector<1x64xf32>
    %cst_10 = arith.constant dense<0.000000e+00> : vector<8x64xf32>
    %10 = tpu.matmul %7, %8, %cst_10 {dimension_numbers = #tpu.dot_dimension_numbers<[1], [0], [0], [1], [0, 0, 1, 1], [], []>} : vector<8x64xf32>, vector<64x64xf32>, vector<8x64xf32> -> vector<8x64xf32>
    %11 = vector.broadcast %9 : vector<1x64xf32> to vector<8x64xf32>
    %12 = arith.addf %10, %11 : vector<8x64xf32>
    %13 = math.tanh %12 : vector<8x64xf32>
    %c0_11 = arith.constant 0 : index
    %c0_12 = arith.constant 0 : index
    %14 = vector.load %arg6[%c0_11, %c0_12] : memref<64x16xf32, #tpu.memory_space<vmem>>, vector<64x16xf32>
    %c0_13 = arith.constant 0 : index
    %c0_14 = arith.constant 0 : index
    %15 = vector.load %arg7[%c0_13, %c0_14] : memref<1x16xf32, #tpu.memory_space<vmem>>, vector<1x16xf32>
    %cst_15 = arith.constant dense<0.000000e+00> : vector<8x16xf32>
    %16 = tpu.matmul %13, %14, %cst_15 {dimension_numbers = #tpu.dot_dimension_numbers<[1], [0], [0], [1], [0, 0, 1, 1], [], []>} : vector<8x64xf32>, vector<64x16xf32>, vector<8x16xf32> -> vector<8x16xf32>
    %17 = vector.broadcast %15 : vector<1x16xf32> to vector<8x16xf32>
    %18 = arith.addf %16, %17 : vector<8x16xf32>
    %c0_16 = arith.constant 0 : index
    %c0_17 = arith.constant 0 : index
    %19 = vector.load %arg8[%c0_16, %c0_17] : memref<8x16xf32, #tpu.memory_space<vmem>>, vector<8x16xf32>
    tpu.vector_store %arg8[%c0_16, %c0_17], %18 {strides = array<i32>} : memref<8x16xf32, #tpu.memory_space<vmem>>, vector<8x16xf32>,
    return
  }
  func.func @transform_0(%arg0: i32) -> (i32, i32) {
    %c0_i32 = arith.constant 0 : i32
    %c0_i32_0 = arith.constant 0 : i32
    return %arg0, %c0_i32 : i32, i32
  }
  func.func @transform_1(%arg0: i32) -> (i32, i32) {
    %c0_i32 = arith.constant 0 : i32
    %c0_i32_0 = arith.constant 0 : i32
    %c0_i32_1 = arith.constant 0 : i32
    return %c0_i32, %c0_i32_0 : i32, i32
  }
  func.func @transform_2(%arg0: i32) -> (i32, i32) {
    %c0_i32 = arith.constant 0 : i32
    %c0_i32_0 = arith.constant 0 : i32
    %c0_i32_1 = arith.constant 0 : i32
    return %c0_i32, %c0_i32_0 : i32, i32
  }
  func.func @transform_3(%arg0: i32) -> (i32, i32) {
    %c0_i32 = arith.constant 0 : i32
    %c0_i32_0 = arith.constant 0 : i32
    %c0_i32_1 = arith.constant 0 : i32
    return %c0_i32, %c0_i32_0 : i32, i32
  }
  func.func @transform_4(%arg0: i32) -> (i32, i32) {
    %c0_i32 = arith.constant 0 : i32
    %c0_i32_0 = arith.constant 0 : i32
    %c0_i32_1 = arith.constant 0 : i32
    return %c0_i32, %c0_i32_0 : i32, i32
  }
  func.func @transform_5(%arg0: i32) -> (i32, i32) {
    %c0_i32 = arith.constant 0 : i32
    %c0_i32_0 = arith.constant 0 : i32
    %c0_i32_1 = arith.constant 0 : i32
    return %c0_i32, %c0_i32_0 : i32, i32
  }
  func.func @transform_6(%arg0: i32) -> (i32, i32) {
    %c0_i32 = arith.constant 0 : i32
    %c0_i32_0 = arith.constant 0 : i32
    %c0_i32_1 = arith.constant 0 : i32
    return %c0_i32, %c0_i32_0 : i32, i32
  }
  func.func @transform_7(%arg0: i32) -> (i32, i32) {
    %c0_i32 = arith.constant 0 : i32
    %c0_i32_0 = arith.constant 0 : i32
    return %arg0, %c0_i32 : i32, i32
  }
}

</mosaic_0001>

<llo_original>
// kernel: tpu_custom_call.1
$region0: #{tpu_custom_call.1}
  #allocation0 [shape = 'u32[]', space=smem, size = 0x4, offset = 0x4, fixed_abs, tag = 'smem constant byte address 0x4 - core index']
  #allocation1 [shape = 'u32[144,128]{1,0:T(1,128)}', space=vmem, size = 0x12000, scoped, tag = 'internal scratch']
  %s0 = inlined_call_operand.vmem [shape: f32[8,32], index: 0, kind: input, shape index: {}]
  %s1 = inlined_call_operand.hbm [shape: f32[32,64], index: 1, kind: input, shape index: {}]
  %s2 = inlined_call_operand.vmem [shape: f32[1,64], index: 2, kind: input, shape index: {}]
  %s3 = inlined_call_operand.vmem [shape: f32[64,64], index: 3, kind: input, shape index: {}]
  %s4 = inlined_call_operand.vmem [shape: f32[1,64], index: 4, kind: input, shape index: {}]
  %s5 = inlined_call_operand.vmem [shape: f32[64,16], index: 5, kind: input, shape index: {}]
  %s6 = inlined_call_operand.vmem [shape: f32[1,16], index: 6, kind: input, shape index: {}]
  %s7 = inlined_call_operand.hbm [shape: f32[8,16], index: 7, kind: output, shape index: {}]
  %s8 = sld [smem:[#allocation0]]
  $region42: #{tpu_custom_call.1} parent=0
    _
  %s10 = ssub.s32 1, %s8
  %s11 = scalar_select 0, %s10, %s8
  $region1: #{tpu_custom_call.1} parent=0
    #allocation2 [shape = 'u8[16384]{0}', space=vmem, size = 0x4000, scoped, tag = 'input window, operand 1, single buffered']
    #allocation3 [shape = 's32[1]{0}', space=sflag, size = 0x4, scoped, tag = 'scoped memory for tpu_custom_call.1']
    #allocation4 [shape = 's32[1]{0}', space=sflag, size = 0x4, scoped, tag = 'scoped memory for tpu_custom_call.1']
    #allocation5 [shape = 'u8[4096]{0}', space=vmem, size = 0x1000, scoped, tag = 'output window, operand 0, single buffered']
    %12 = vsyncpa [#allocation3], 0
    %13 = vsyncpa [#allocation4], 0
    // Predicated region
    $region2: #{tpu_custom_call.1} parent=1 // pred_check
      _
    $region3: #{tpu_custom_call.1} parent=1 // pred_check_branch
      %15 = sbr.rel (0) target = $region5
    $region4: #{tpu_custom_call.1} parent=1 // pred_region
      _
    $region5: #{tpu_custom_call.1} parent=1 // pred_fallthru
      _
    // Predicated region
    $region6: #{tpu_custom_call.1} parent=1 // pred_check
      _
    $region7: #{tpu_custom_call.1} parent=1 // pred_check_branch
      %17 = sbr.rel (0) target = $region9
    $region8: #{tpu_custom_call.1} parent=1 // pred_region
      %s19 = ssub.s32 512, 512
      %20 = vsyncadd [#allocation3], %s19
      %s21 = sshll.u32 [#allocation2], 4
      %s22 = int_to_ptr.vmem [resolvable:$true] %s21
      %27 = dma.hbm_to_vmem [thread:$0]  %s1, 512, %s22, [#allocation3], 128, 128, 8
    $region9: #{tpu_custom_call.1} parent=1 // pred_fallthru
      _
    // Predicated region
    $region10: #{tpu_custom_call.1} parent=1 // pred_check
      _
    $region11: #{tpu_custom_call.1} parent=1 // pred_check_branch
      %29 = sbr.rel (0) target = $region13
    $region12: #{tpu_custom_call.1} parent=1 // pred_region
      _
    $region13: #{tpu_custom_call.1} parent=1 // pred_fallthru
      _
    // Predicated region
    $region14: #{tpu_custom_call.1} parent=1 // pred_check
      _
    $region15: #{tpu_custom_call.1} parent=1 // pred_check_branch
      %31 = sbr.rel (0) target = $region17
    $region16: #{tpu_custom_call.1} parent=1 // pred_region
      _
    $region17: #{tpu_custom_call.1} parent=1 // pred_fallthru
      _
    // Predicated region
    $region18: #{tpu_custom_call.1} parent=1 // pred_check
      _
    $region19: #{tpu_custom_call.1} parent=1 // pred_check_branch
      %33 = sbr.rel (0) target = $region21
    $region20: #{tpu_custom_call.1} parent=1 // pred_region
      _
    $region21: #{tpu_custom_call.1} parent=1 // pred_fallthru
      _
    // Predicated region
    $region22: #{tpu_custom_call.1} parent=1 // pred_check
      _
    $region23: #{tpu_custom_call.1} parent=1 // pred_check_branch
      %35 = sbr.rel (0) target = $region25
    $region24: #{tpu_custom_call.1} parent=1 // pred_region
      _
    $region25: #{tpu_custom_call.1} parent=1 // pred_fallthru
      _
    // Predicated region
    $region26: #{tpu_custom_call.1} parent=1 // pred_check
      _
    $region27: #{tpu_custom_call.1} parent=1 // pred_check_branch
      %37 = sbr.rel (0) target = $region29
    $region28: #{tpu_custom_call.1} parent=1 // pred_region
      _
    $region29: #{tpu_custom_call.1} parent=1 // pred_fallthru
      _
    // Predicated region
    $region30: #{tpu_custom_call.1} parent=1 // pred_check
      _
    $region31: #{tpu_custom_call.1} parent=1 // pred_check_branch
      %39 = sbr.rel (0) target = $region33
    $region32: #{tpu_custom_call.1} parent=1 // pred_region
      %40 = dma.done [#allocation3], 512
    $region33: #{tpu_custom_call.1} parent=1 // pred_fallthru
      _
    %v41 = vld [vmem:[%s0] sm:$0xff]
    %v42 = vld [vmem:[#allocation2] sm:$0xff]
    %v43 = vld [vmem:[#allocation2 + $0x8] sm:$0xff]
    %v44 = vld [vmem:[#allocation2 + $0x10] sm:$0xff]
    %v45 = vld [vmem:[#allocation2 + $0x18] sm:$0xff]
    %v46 = vld [vmem:[%s2] sm:$0x1]
    %v48 = vlaneseq
    %v49 = vshrl.u32 %v48, 7
    %v50 = vsub.s32 0, %v49
    %v51 = vrot.slane %v46, %v50
    %vm53 = vcmask 261120
    %v55 = vsel %vm53, %v41, 0
    %57 = vmatprep.subr.mxu0 0.0
    %58 = vmatpush1.msra.mxu0 %v42
    %59 = vmatprep.subr.mxu0 0.0
    %60 = vmatpush1.msra.mxu0 %v43
    %61 = vmatprep.subr.mxu0 0.0
    %62 = vmatpush1.msra.mxu0 %v44
    %63 = vmatprep.subr.mxu0 0.0
    %64 = vmatpush1.msra.mxu0 %v45
    %65 = vmatprep.subr.mxu0 0.0
    %66 = vmatpush1.msra.mxu0 0.0
    %67 = vmatprep.subr.mxu0 0.0
    %68 = vmatpush1.msra.mxu0 0.0
    %69 = vmatprep.subr.mxu0 0.0
    %70 = vmatpush1.msra.mxu0 0.0
    %71 = vmatprep.subr.mxu0 0.0
    %72 = vmatpush1.msra.mxu0 0.0
    %73 = vmatprep.subr.mxu0 0.0
    %74 = vmatpush1.msra.mxu0 0.0
    %75 = vmatprep.subr.mxu0 0.0
    %76 = vmatpush1.msra.mxu0 0.0
    %77 = vmatprep.subr.mxu0 0.0
    %78 = vmatpush1.msra.mxu0 0.0
    %79 = vmatprep.subr.mxu0 0.0
    %80 = vmatpush1.msra.mxu0 0.0
    %81 = vmatprep.subr.mxu0 0.0
    %82 = vmatpush1.msra.mxu0 0.0
    %83 = vmatprep.subr.mxu0 0.0
    %84 = vmatpush1.msra.mxu0 0.0
    %85 = vmatprep.subr.mxu0 0.0
    %86 = vmatpush1.msra.mxu0 0.0
    %87 = vmatprep.subr.mxu0 0.0
    %88 = vmatpush1.msra.mxu0 0.0
    %89 = vmatprep.subr.mxu0 0.0
    %90 = vmatpush1.msra.mxu0 0.0
    %91 = vmatprep.subr.mxu0 0.0
    %92 = vmatpush1.msra.mxu0 0.0
    %93 = vmatprep.subr.mxu0 0.0
    %94 = vmatpush1.msra.mxu0 0.0
    %95 = vmatprep.subr.mxu0 0.0
    %96 = vmatpush1.msra.mxu0 0.0
    %97 = vmatprep.subr.mxu0 0.0
    %98 = vmatpush1.msra.mxu0 0.0
    %99 = vmatprep.subr.mxu0 0.0
    %100 = vmatpush1.msra.mxu0 0.0
    %101 = vmatprep.subr.mxu0 0.0
    %102 = vmatpush1.msra.mxu0 0.0
    %103 = vmatprep.subr.mxu0 0.0
    %104 = vmatpush1.msra.mxu0 0.0
    %105 = vmatprep.subr.mxu0 0.0
    %106 = vmatpush1.msra.mxu0 0.0
    %107 = vmatprep.subr.mxu0 0.0
    %108 = vmatpush1.msra.mxu0 0.0
    %109 = vmatprep.subr.mxu0 0.0
    %110 = vmatpush1.msra.mxu0 0.0
    %111 = vmatprep.subr.mxu0 0.0
    %112 = vmatpush1.msra.mxu0 0.0
    %113 = vmatprep.subr.mxu0 0.0
    %114 = vmatpush1.msra.mxu0 0.0
    %115 = vmatprep.subr.mxu0 0.0
    %116 = vmatpush1.msra.mxu0 0.0
    %117 = vmatprep.subr.mxu0 0.0
    %118 = vmatpush1.msra.mxu0 0.0
    %119 = vmatprep.subr.mxu0 0.0
    %120 = vmatpush1.msra.mxu0 0.0
    %121 = vmatprep.mubr.f32.mxu0 0.0
    %122 = vmatmul.mubr.f32.gmra.mrb[0].mxu0 %v55
    %v123 = vpop.f32.mrb[0].mxu0
    %v124 = vadd.f32 %v51, %v123
    %v125 = vpop.f32.mrb[0].mxu0
    %126 = vdwg.mxu0
    %v127 = vmax.f32 %v124, 0.0
    %v128 = vld [vmem:[%s3] sm:$0xff]
    %v129 = vld [vmem:[%s3 + $0x8] sm:$0xff]
    %v130 = vld [vmem:[%s3 + $0x10] sm:$0xff]
    %v131 = vld [vmem:[%s3 + $0x18] sm:$0xff]
    %v132 = vld [vmem:[%s3 + $0x20] sm:$0xff]
    %v133 = vld [vmem:[%s3 + $0x28] sm:$0xff]
    %v134 = vld [vmem:[%s3 + $0x30] sm:$0xff]
    %v135 = vld [vmem:[%s3 + $0x38] sm:$0xff]
    %v136 = vld [vmem:[%s4] sm:$0x1]
    %v138 = vlaneseq
    %v139 = vshrl.u32 %v138, 7
    %v140 = vsub.s32 0, %v139
    %v141 = vrot.slane %v136, %v140
    %vm143 = vcmask 523264
    %v145 = vsel %vm143, %v127, 0
    %147 = vmatprep.subr.mxu0 0.0
    %148 = vmatpush1.msra.mxu0 %v128
    %149 = vmatprep.subr.mxu0 0.0
    %150 = vmatpush1.msra.mxu0 %v129
    %151 = vmatprep.subr.mxu0 0.0
    %152 = vmatpush1.msra.mxu0 %v130
    %153 = vmatprep.subr.mxu0 0.0
    %154 = vmatpush1.msra.mxu0 %v131
    %155 = vmatprep.subr.mxu0 0.0
    %156 = vmatpush1.msra.mxu0 %v132
    %157 = vmatprep.subr.mxu0 0.0
    %158 = vmatpush1.msra.mxu0 %v133
    %159 = vmatprep.subr.mxu0 0.0
    %160 = vmatpush1.msra.mxu0 %v134
    %161 = vmatprep.subr.mxu0 0.0
    %162 = vmatpush1.msra.mxu0 %v135
    %163 = vmatprep.subr.mxu0 0.0
    %164 = vmatpush1.msra.mxu0 0.0
    %165 = vmatprep.subr.mxu0 0.0
    %166 = vmatpush1.msra.mxu0 0.0
    %167 = vmatprep.subr.mxu0 0.0
    %168 = vmatpush1.msra.mxu0 0.0
    %169 = vmatprep.subr.mxu0 0.0
    %170 = vmatpush1.msra.mxu0 0.0
    %171 = vmatprep.subr.mxu0 0.0
    %172 = vmatpush1.msra.mxu0 0.0
    %173 = vmatprep.subr.mxu0 0.0
    %174 = vmatpush1.msra.mxu0 0.0
    %175 = vmatprep.subr.mxu0 0.0
    %176 = vmatpush1.msra.mxu0 0.0
    %177 = vmatprep.subr.mxu0 0.0
    %178 = vmatpush1.msra.mxu0 0.0
    %179 = vmatprep.subr.mxu0 0.0
    %180 = vmatpush1.msra.mxu0 0.0
    %181 = vmatprep.subr.mxu0 0.0
    %182 = vmatpush1.msra.mxu0 0.0
    %183 = vmatprep.subr.mxu0 0.0
    %184 = vmatpush1.msra.mxu0 0.0
    %185 = vmatprep.subr.mxu0 0.0
    %186 = vmatpush1.msra.mxu0 0.0
    %187 = vmatprep.subr.mxu0 0.0
    %188 = vmatpush1.msra.mxu0 0.0
    %189 = vmatprep.subr.mxu0 0.0
    %190 = vmatpush1.msra.mxu0 0.0
    %191 = vmatprep.subr.mxu0 0.0
    %192 = vmatpush1.msra.mxu0 0.0
    %193 = vmatprep.subr.mxu0 0.0
    %194 = vmatpush1.msra.mxu0 0.0
    %195 = vmatprep.subr.mxu0 0.0
    %196 = vmatpush1.msra.mxu0 0.0
    %197 = vmatprep.subr.mxu0 0.0
    %198 = vmatpush1.msra.mxu0 0.0
    %199 = vmatprep.subr.mxu0 0.0
    %200 = vmatpush1.msra.mxu0 0.0
    %201 = vmatprep.subr.mxu0 0.0
    %202 = vmatpush1.msra.mxu0 0.0
    %203 = vmatprep.subr.mxu0 0.0
    %204 = vmatpush1.msra.mxu0 0.0
    %205 = vmatprep.subr.mxu0 0.0
    %206 = vmatpush1.msra.mxu0 0.0
    %207 = vmatprep.subr.mxu0 0.0
    %208 = vmatpush1.msra.mxu0 0.0
    %209 = vmatprep.subr.mxu0 0.0
    %210 = vmatpush1.msra.mxu0 0.0
    %211 = vmatprep.mubr.f32.mxu0 0.0
    %212 = vmatmul.mubr.f32.gmra.mrb[0].mxu0 %v145
    %v213 = vpop.f32.mrb[0].mxu0
    %v214 = vadd.f32 %v141, %v213
    %v215 = vpop.f32.mrb[0].mxu0
    %216 = vdwg.mxu0
    %v217 = vtanh.pop %v214
    %v218 = vld [vmem:[%s5] sm:$0xff]
    %v219 = vld [vmem:[%s5 + $0x8] sm:$0xff]
    %v220 = vld [vmem:[%s5 + $0x10] sm:$0xff]
    %v221 = vld [vmem:[%s5 + $0x18] sm:$0xff]
    %v222 = vld [vmem:[%s5 + $0x20] sm:$0xff]
    %v223 = vld [vmem:[%s5 + $0x28] sm:$0xff]
    %v224 = vld [vmem:[%s5 + $0x30] sm:$0xff]
    %v225 = vld [vmem:[%s5 + $0x38] sm:$0xff]
    %v226 = vld [vmem:[%s6] sm:$0x1]
    %v228 = vlaneseq
    %v229 = vshrl.u32 %v228, 7
    %v230 = vsub.s32 0, %v229
    %v231 = vrot.slane %v226, %v230
    %v234 = vsel %vm143, %v217, 0
    %236 = vmatprep.subr.mxu0 0.0
    %237 = vmatpush1.msra.mxu0 %v218
    %238 = vmatprep.subr.mxu0 0.0
    %239 = vmatpush1.msra.mxu0 %v219
    %240 = vmatprep.subr.mxu0 0.0
    %241 = vmatpush1.msra.mxu0 %v220
    %242 = vmatprep.subr.mxu0 0.0
    %243 = vmatpush1.msra.mxu0 %v221
    %244 = vmatprep.subr.mxu0 0.0
    %245 = vmatpush1.msra.mxu0 %v222
    %246 = vmatprep.subr.mxu0 0.0
    %247 = vmatpush1.msra.mxu0 %v223
    %248 = vmatprep.subr.mxu0 0.0
    %249 = vmatpush1.msra.mxu0 %v224
    %250 = vmatprep.subr.mxu0 0.0
    %251 = vmatpush1.msra.mxu0 %v225
    %252 = vmatprep.subr.mxu0 0.0
    %253 = vmatpush1.msra.mxu0 0.0
    %254 = vmatprep.subr.mxu0 0.0
    %255 = vmatpush1.msra.mxu0 0.0
    %256 = vmatprep.subr.mxu0 0.0
    %257 = vmatpush1.msra.mxu0 0.0
    %258 = vmatprep.subr.mxu0 0.0
    %259 = vmatpush1.msra.mxu0 0.0
    %260 = vmatprep.subr.mxu0 0.0
    %261 = vmatpush1.msra.mxu0 0.0
    %262 = vmatprep.subr.mxu0 0.0
    %263 = vmatpush1.msra.mxu0 0.0
    %264 = vmatprep.subr.mxu0 0.0
    %265 = vmatpush1.msra.mxu0 0.0
    %266 = vmatprep.subr.mxu0 0.0
    %267 = vmatpush1.msra.mxu0 0.0
    %268 = vmatprep.subr.mxu0 0.0
    %269 = vmatpush1.msra.mxu0 0.0
    %270 = vmatprep.subr.mxu0 0.0
    %271 = vmatpush1.msra.mxu0 0.0
    %272 = vmatprep.subr.mxu0 0.0
    %273 = vmatpush1.msra.mxu0 0.0
    %274 = vmatprep.subr.mxu0 0.0
    %275 = vmatpush1.msra.mxu0 0.0
    %276 = vmatprep.subr.mxu0 0.0
    %277 = vmatpush1.msra.mxu0 0.0
    %278 = vmatprep.subr.mxu0 0.0
    %279 = vmatpush1.msra.mxu0 0.0
    %280 = vmatprep.subr.mxu0 0.0
    %281 = vmatpush1.msra.mxu0 0.0
    %282 = vmatprep.subr.mxu0 0.0
    %283 = vmatpush1.msra.mxu0 0.0
    %284 = vmatprep.subr.mxu0 0.0
    %285 = vmatpush1.msra.mxu0 0.0
    %286 = vmatprep.subr.mxu0 0.0
    %287 = vmatpush1.msra.mxu0 0.0
    %288 = vmatprep.subr.mxu0 0.0
    %289 = vmatpush1.msra.mxu0 0.0
    %290 = vmatprep.subr.mxu0 0.0
    %291 = vmatpush1.msra.mxu0 0.0
    %292 = vmatprep.subr.mxu0 0.0
    %293 = vmatpush1.msra.mxu0 0.0
    %294 = vmatprep.subr.mxu0 0.0
    %295 = vmatpush1.msra.mxu0 0.0
    %296 = vmatprep.subr.mxu0 0.0
    %297 = vmatpush1.msra.mxu0 0.0
    %298 = vmatprep.subr.mxu0 0.0
    %299 = vmatpush1.msra.mxu0 0.0
    %300 = vmatprep.mubr.f32.mxu0 0.0
    %301 = vmatmul.mubr.f32.gmra.mrb[0].mxu0 %v234
    %v302 = vpop.f32.mrb[0].mxu0
    %v303 = vadd.f32 %v231, %v302
    %v304 = vpop.f32.mrb[0].mxu0
    %305 = vdwg.mxu0
    %vm306 = vcmask 130048
    %307 = vst.msk [vmem:[#allocation5] sm:$0xff] %vm306, %v303
    // Predicated region
    $region34: #{tpu_custom_call.1} parent=1 // pred_check
      _
    $region35: #{tpu_custom_call.1} parent=1 // pred_check_branch
      %309 = sbr.rel (0) target = $region37
    $region36: #{tpu_custom_call.1} parent=1 // pred_region
      %s311 = ssub.s32 128, 128
      %312 = vsyncadd [#allocation4], %s311
      %s314 = sshll.u32 [#allocation5], 4
      %s315 = int_to_ptr.vmem [resolvable:$true] %s314
      %317 = dma.vmem_to_hbm [thread:$0]  %s315, 128, %s7, [#allocation4]
    $region37: #{tpu_custom_call.1} parent=1 // pred_fallthru
      _
    // Predicated region
    $region38: #{tpu_custom_call.1} parent=1 // pred_check
      _
    $region39: #{tpu_custom_call.1} parent=1 // pred_check_branch
      %319 = sbr.rel (0) target = $region41
    $region40: #{tpu_custom_call.1} parent=1 // pred_region
      %320 = dma.done [#allocation4], 128
    $region41: #{tpu_custom_call.1} parent=1 // pred_fallthru
      _
    %321 = vsyncpa [#allocation3], 1
    %322 = vsyncpa [#allocation4], 1

// kernel: tpu_custom_call.1
$region0: #{tpu_custom_call.1}
  #allocation0 [shape = 'u32[]', space=smem, size = 0x4, offset = 0x4, fixed_abs, tag = 'smem constant byte address 0x4 - core index']
  #allocation1 [shape = 'u32[144,128]{1,0:T(1,128)}', space=vmem, size = 0x12000, scoped, tag = 'internal scratch']
  %s0 = inlined_call_operand.vmem [shape: f32[8,32], index: 0, kind: input, shape index: {}]
  %s1 = inlined_call_operand.hbm [shape: f32[32,64], index: 1, kind: input, shape index: {}]
  %s2 = inlined_call_operand.vmem [shape: f32[1,64], index: 2, kind: input, shape index: {}]
  %s3 = inlined_call_operand.vmem [shape: f32[64,64], index: 3, kind: input, shape index: {}]
  %s4 = inlined_call_operand.vmem [shape: f32[1,64], index: 4, kind: input, shape index: {}]
  %s5 = inlined_call_operand.vmem [shape: f32[64,16], index: 5, kind: input, shape index: {}]
  %s6 = inlined_call_operand.vmem [shape: f32[1,16], index: 6, kind: input, shape index: {}]
  %s7 = inlined_call_operand.hbm [shape: f32[8,16], index: 7, kind: output, shape index: {}]
  %s8 = sld [smem:[#allocation0]]
  $region42: #{tpu_custom_call.1} parent=0
    _
  %s10 = ssub.s32 1, %s8
  %s11 = scalar_select 0, %s10, %s8
  $region1: #{tpu_custom_call.1} parent=0
    #allocation2 [shape = 'u8[16384]{0}', space=vmem, size = 0x4000, scoped, tag = 'input window, operand 1, single buffered']
    #allocation3 [shape = 's32[1]{0}', space=sflag, size = 0x4, scoped, tag = 'scoped memory for tpu_custom_call.1']
    #allocation4 [shape = 's32[1]{0}', space=sflag, size = 0x4, scoped, tag = 'scoped memory for tpu_custom_call.1']
    #allocation5 [shape = 'u8[4096]{0}', space=vmem, size = 0x1000, scoped, tag = 'output window, operand 0, single buffered']
    %12 = vsyncpa [#allocation3], 0
    %13 = vsyncpa [#allocation4], 0
    // Predicated region
    $region2: #{tpu_custom_call.1} parent=1 // pred_check
      _
    $region3: #{tpu_custom_call.1} parent=1 // pred_check_branch
      %15 = sbr.rel (0) target = $region5
    $region4: #{tpu_custom_call.1} parent=1 // pred_region
      _
    $region5: #{tpu_custom_call.1} parent=1 // pred_fallthru
      _
    // Predicated region
    $region6: #{tpu_custom_call.1} parent=1 // pred_check
      _
    $region7: #{tpu_custom_call.1} parent=1 // pred_check_branch
      %17 = sbr.rel (0) target = $region9
    $region8: #{tpu_custom_call.1} parent=1 // pred_region
      %s19 = ssub.s32 512, 512
      %20 = vsyncadd [#allocation3], %s19
      %s21 = sshll.u32 [#allocation2], 4
      %s22 = int_to_ptr.vmem [resolvable:$true] %s21
      %27 = dma.hbm_to_vmem [thread:$0]  %s1, 512, %s22, [#allocation3], 128, 128, 8
    $region9: #{tpu_custom_call.1} parent=1 // pred_fallthru
      _
    // Predicated region
    $region10: #{tpu_custom_call.1} parent=1 // pred_check
      _
    $region11: #{tpu_custom_call.1} parent=1 // pred_check_branch
      %29 = sbr.rel (0) target = $region13
    $region12: #{tpu_custom_call.1} parent=1 // pred_region
      _
    $region13: #{tpu_custom_call.1} parent=1 // pred_fallthru
      _
    // Predicated region
    $region14: #{tpu_custom_call.1} parent=1 // pred_check
      _
    $region15: #{tpu_custom_call.1} parent=1 // pred_check_branch
      %31 = sbr.rel (0) target = $region17
    $region16: #{tpu_custom_call.1} parent=1 // pred_region
      _
    $region17: #{tpu_custom_call.1} parent=1 // pred_fallthru
      _
    // Predicated region
    $region18: #{tpu_custom_call.1} parent=1 // pred_check
      _
    $region19: #{tpu_custom_call.1} parent=1 // pred_check_branch
      %33 = sbr.rel (0) target = $region21
    $region20: #{tpu_custom_call.1} parent=1 // pred_region
      _
    $region21: #{tpu_custom_call.1} parent=1 // pred_fallthru
      _
    // Predicated region
    $region22: #{tpu_custom_call.1} parent=1 // pred_check
      _
    $region23: #{tpu_custom_call.1} parent=1 // pred_check_branch
      %35 = sbr.rel (0) target = $region25
    $region24: #{tpu_custom_call.1} parent=1 // pred_region
      _
    $region25: #{tpu_custom_call.1} parent=1 // pred_fallthru
      _
    // Predicated region
    $region26: #{tpu_custom_call.1} parent=1 // pred_check
      _
    $region27: #{tpu_custom_call.1} parent=1 // pred_check_branch
      %37 = sbr.rel (0) target = $region29
    $region28: #{tpu_custom_call.1} parent=1 // pred_region
      _
    $region29: #{tpu_custom_call.1} parent=1 // pred_fallthru
      _
    // Predicated region
    $region30: #{tpu_custom_call.1} parent=1 // pred_check
      _
    $region31: #{tpu_custom_call.1} parent=1 // pred_check_branch
      %39 = sbr.rel (0) target = $region33
    $region32: #{tpu_custom_call.1} parent=1 // pred_region
      %40 = dma.done [#allocation3], 512
    $region33: #{tpu_custom_call.1} parent=1 // pred_fallthru
      _
    %v41 = vld [vmem:[%s0] sm:$0xff]
    %v42 = vld [vmem:[#allocation2] sm:$0xff]
    %v43 = vld [vmem:[#allocation2 + $0x8] sm:$0xff]
    %v44 = vld [vmem:[#allocation2 + $0x10] sm:$0xff]
    %v45 = vld [vmem:[#allocation2 + $0x18] sm:$0xff]
    %v46 = vld [vmem:[%s2] sm:$0x1]
    %v48 = vlaneseq
    %v49 = vshrl.u32 %v48, 7
    %v50 = vsub.s32 0, %v49
    %v51 = vrot.slane %v46, %v50
    %vm53 = vcmask 261120
    %v55 = vsel %vm53, %v41, 0
    %57 = vmatprep.subr.mxu0 0.0
    %58 = vmatpush1.msra.mxu0 %v42
    %59 = vmatprep.subr.mxu0 0.0
    %60 = vmatpush1.msra.mxu0 %v43
    %61 = vmatprep.subr.mxu0 0.0
    %62 = vmatpush1.msra.mxu0 %v44
    %63 = vmatprep.subr.mxu0 0.0
    %64 = vmatpush1.msra.mxu0 %v45
    %65 = vmatprep.subr.mxu0 0.0
    %66 = vmatpush1.msra.mxu0 0.0
    %67 = vmatprep.subr.mxu0 0.0
    %68 = vmatpush1.msra.mxu0 0.0
    %69 = vmatprep.subr.mxu0 0.0
    %70 = vmatpush1.msra.mxu0 0.0
    %71 = vmatprep.subr.mxu0 0.0
    %72 = vmatpush1.msra.mxu0 0.0
    %73 = vmatprep.subr.mxu0 0.0
    %74 = vmatpush1.msra.mxu0 0.0
    %75 = vmatprep.subr.mxu0 0.0
    %76 = vmatpush1.msra.mxu0 0.0
    %77 = vmatprep.subr.mxu0 0.0
    %78 = vmatpush1.msra.mxu0 0.0
    %79 = vmatprep.subr.mxu0 0.0
    %80 = vmatpush1.msra.mxu0 0.0
    %81 = vmatprep.subr.mxu0 0.0
    %82 = vmatpush1.msra.mxu0 0.0
    %83 = vmatprep.subr.mxu0 0.0
    %84 = vmatpush1.msra.mxu0 0.0
    %85 = vmatprep.subr.mxu0 0.0
    %86 = vmatpush1.msra.mxu0 0.0
    %87 = vmatprep.subr.mxu0 0.0
    %88 = vmatpush1.msra.mxu0 0.0
    %89 = vmatprep.subr.mxu0 0.0
    %90 = vmatpush1.msra.mxu0 0.0
    %91 = vmatprep.subr.mxu0 0.0
    %92 = vmatpush1.msra.mxu0 0.0
    %93 = vmatprep.subr.mxu0 0.0
    %94 = vmatpush1.msra.mxu0 0.0
    %95 = vmatprep.subr.mxu0 0.0
    %96 = vmatpush1.msra.mxu0 0.0
    %97 = vmatprep.subr.mxu0 0.0
    %98 = vmatpush1.msra.mxu0 0.0
    %99 = vmatprep.subr.mxu0 0.0
    %100 = vmatpush1.msra.mxu0 0.0
    %101 = vmatprep.subr.mxu0 0.0
    %102 = vmatpush1.msra.mxu0 0.0
    %103 = vmatprep.subr.mxu0 0.0
    %104 = vmatpush1.msra.mxu0 0.0
    %105 = vmatprep.subr.mxu0 0.0
    %106 = vmatpush1.msra.mxu0 0.0
    %107 = vmatprep.subr.mxu0 0.0
    %108 = vmatpush1.msra.mxu0 0.0
    %109 = vmatprep.subr.mxu0 0.0
    %110 = vmatpush1.msra.mxu0 0.0
    %111 = vmatprep.subr.mxu0 0.0
    %112 = vmatpush1.msra.mxu0 0.0
    %113 = vmatprep.subr.mxu0 0.0
    %114 = vmatpush1.msra.mxu0 0.0
    %115 = vmatprep.subr.mxu0 0.0
    %116 = vmatpush1.msra.mxu0 0.0
    %117 = vmatprep.subr.mxu0 0.0
    %118 = vmatpush1.msra.mxu0 0.0
    %119 = vmatprep.subr.mxu0 0.0
    %120 = vmatpush1.msra.mxu0 0.0
    %121 = vmatprep.mubr.f32.mxu0 0.0
    %122 = vmatmul.mubr.f32.gmra.mrb[0].mxu0 %v55
    %v123 = vpop.f32.mrb[0].mxu0
    %v124 = vadd.f32 %v51, %v123
    %v125 = vpop.f32.mrb[0].mxu0
    %126 = vdwg.mxu0
    %v127 = vmax.f32 %v124, 0.0
    %v128 = vld [vmem:[%s3] sm:$0xff]
    %v129 = vld [vmem:[%s3 + $0x8] sm:$0xff]
    %v130 = vld [vmem:[%s3 + $0x10] sm:$0xff]
    %v131 = vld [vmem:[%s3 + $0x18] sm:$0xff]
    %v132 = vld [vmem:[%s3 + $0x20] sm:$0xff]
    %v133 = vld [vmem:[%s3 + $0x28] sm:$0xff]
    %v134 = vld [vmem:[%s3 + $0x30] sm:$0xff]
    %v135 = vld [vmem:[%s3 + $0x38] sm:$0xff]
    %v136 = vld [vmem:[%s4] sm:$0x1]
    %v138 = vlaneseq
    %v139 = vshrl.u32 %v138, 7
    %v140 = vsub.s32 0, %v139
    %v141 = vrot.slane %v136, %v140
    %vm143 = vcmask 523264
    %v145 = vsel %vm143, %v127, 0
    %147 = vmatprep.subr.mxu0 0.0
    %148 = vmatpush1.msra.mxu0 %v128
    %149 = vmatprep.subr.mxu0 0.0
    %150 = vmatpush1.msra.mxu0 %v129
    %151 = vmatprep.subr.mxu0 0.0
    %152 = vmatpush1.msra.mxu0 %v130
    %153 = vmatprep.subr.mxu0 0.0
    %154 = vmatpush1.msra.mxu0 %v131
    %155 = vmatprep.subr.mxu0 0.0
    %156 = vmatpush1.msra.mxu0 %v132
    %157 = vmatprep.subr.mxu0 0.0
    %158 = vmatpush1.msra.mxu0 %v133
    %159 = vmatprep.subr.mxu0 0.0
    %160 = vmatpush1.msra.mxu0 %v134
    %161 = vmatprep.subr.mxu0 0.0
    %162 = vmatpush1.msra.mxu0 %v135
    %163 = vmatprep.subr.mxu0 0.0
    %164 = vmatpush1.msra.mxu0 0.0
    %165 = vmatprep.subr.mxu0 0.0
    %166 = vmatpush1.msra.mxu0 0.0
    %167 = vmatprep.subr.mxu0 0.0
    %168 = vmatpush1.msra.mxu0 0.0
    %169 = vmatprep.subr.mxu0 0.0
    %170 = vmatpush1.msra.mxu0 0.0
    %171 = vmatprep.subr.mxu0 0.0
    %172 = vmatpush1.msra.mxu0 0.0
    %173 = vmatprep.subr.mxu0 0.0
    %174 = vmatpush1.msra.mxu0 0.0
    %175 = vmatprep.subr.mxu0 0.0
    %176 = vmatpush1.msra.mxu0 0.0
    %177 = vmatprep.subr.mxu0 0.0
    %178 = vmatpush1.msra.mxu0 0.0
    %179 = vmatprep.subr.mxu0 0.0
    %180 = vmatpush1.msra.mxu0 0.0
    %181 = vmatprep.subr.mxu0 0.0
    %182 = vmatpush1.msra.mxu0 0.0
    %183 = vmatprep.subr.mxu0 0.0
    %184 = vmatpush1.msra.mxu0 0.0
    %185 = vmatprep.subr.mxu0 0.0
    %186 = vmatpush1.msra.mxu0 0.0
    %187 = vmatprep.subr.mxu0 0.0
    %188 = vmatpush1.msra.mxu0 0.0
    %189 = vmatprep.subr.mxu0 0.0
    %190 = vmatpush1.msra.mxu0 0.0
    %191 = vmatprep.subr.mxu0 0.0
    %192 = vmatpush1.msra.mxu0 0.0
    %193 = vmatprep.subr.mxu0 0.0
    %194 = vmatpush1.msra.mxu0 0.0
    %195 = vmatprep.subr.mxu0 0.0
    %196 = vmatpush1.msra.mxu0 0.0
    %197 = vmatprep.subr.mxu0 0.0
    %198 = vmatpush1.msra.mxu0 0.0
    %199 = vmatprep.subr.mxu0 0.0
    %200 = vmatpush1.msra.mxu0 0.0
    %201 = vmatprep.subr.mxu0 0.0
    %202 = vmatpush1.msra.mxu0 0.0
    %203 = vmatprep.subr.mxu0 0.0
    %204 = vmatpush1.msra.mxu0 0.0
    %205 = vmatprep.subr.mxu0 0.0
    %206 = vmatpush1.msra.mxu0 0.0
    %207 = vmatprep.subr.mxu0 0.0
    %208 = vmatpush1.msra.mxu0 0.0
    %209 = vmatprep.subr.mxu0 0.0
    %210 = vmatpush1.msra.mxu0 0.0
    %211 = vmatprep.mubr.f32.mxu0 0.0
    %212 = vmatmul.mubr.f32.gmra.mrb[0].mxu0 %v145
    %v213 = vpop.f32.mrb[0].mxu0
    %v214 = vadd.f32 %v141, %v213
    %v215 = vpop.f32.mrb[0].mxu0
    %216 = vdwg.mxu0
    %v217 = vtanh.pop %v214
    %v218 = vld [vmem:[%s5] sm:$0xff]
    %v219 = vld [vmem:[%s5 + $0x8] sm:$0xff]
    %v220 = vld [vmem:[%s5 + $0x10] sm:$0xff]
    %v221 = vld [vmem:[%s5 + $0x18] sm:$0xff]
    %v222 = vld [vmem:[%s5 + $0x20] sm:$0xff]
    %v223 = vld [vmem:[%s5 + $0x28] sm:$0xff]
    %v224 = vld [vmem:[%s5 + $0x30] sm:$0xff]
    %v225 = vld [vmem:[%s5 + $0x38] sm:$0xff]
    %v226 = vld [vmem:[%s6] sm:$0x1]
    %v228 = vlaneseq
    %v229 = vshrl.u32 %v228, 7
    %v230 = vsub.s32 0, %v229
    %v231 = vrot.slane %v226, %v230
    %v234 = vsel %vm143, %v217, 0
    %236 = vmatprep.subr.mxu0 0.0
    %237 = vmatpush1.msra.mxu0 %v218
    %238 = vmatprep.subr.mxu0 0.0
    %239 = vmatpush1.msra.mxu0 %v219
    %240 = vmatprep.subr.mxu0 0.0
    %241 = vmatpush1.msra.mxu0 %v220
    %242 = vmatprep.subr.mxu0 0.0
    %243 = vmatpush1.msra.mxu0 %v221
    %244 = vmatprep.subr.mxu0 0.0
    %245 = vmatpush1.msra.mxu0 %v222
    %246 = vmatprep.subr.mxu0 0.0
    %247 = vmatpush1.msra.mxu0 %v223
    %248 = vmatprep.subr.mxu0 0.0
    %249 = vmatpush1.msra.mxu0 %v224
    %250 = vmatprep.subr.mxu0 0.0
    %251 = vmatpush1.msra.mxu0 %v225
    %252 = vmatprep.subr.mxu0 0.0
    %253 = vmatpush1.msra.mxu0 0.0
    %254 = vmatprep.subr.mxu0 0.0
    %255 = vmatpush1.msra.mxu0 0.0
    %256 = vmatprep.subr.mxu0 0.0
    %257 = vmatpush1.msra.mxu0 0.0
    %258 = vmatprep.subr.mxu0 0.0
    %259 = vmatpush1.msra.mxu0 0.0
    %260 = vmatprep.subr.mxu0 0.0
    %261 = vmatpush1.msra.mxu0 0.0
    %262 = vmatprep.subr.mxu0 0.0
    %263 = vmatpush1.msra.mxu0 0.0
    %264 = vmatprep.subr.mxu0 0.0
    %265 = vmatpush1.msra.mxu0 0.0
    %266 = vmatprep.subr.mxu0 0.0
    %267 = vmatpush1.msra.mxu0 0.0
    %268 = vmatprep.subr.mxu0 0.0
    %269 = vmatpush1.msra.mxu0 0.0
    %270 = vmatprep.subr.mxu0 0.0
    %271 = vmatpush1.msra.mxu0 0.0
    %272 = vmatprep.subr.mxu0 0.0
    %273 = vmatpush1.msra.mxu0 0.0
    %274 = vmatprep.subr.mxu0 0.0
    %275 = vmatpush1.msra.mxu0 0.0
    %276 = vmatprep.subr.mxu0 0.0
    %277 = vmatpush1.msra.mxu0 0.0
    %278 = vmatprep.subr.mxu0 0.0
    %279 = vmatpush1.msra.mxu0 0.0
    %280 = vmatprep.subr.mxu0 0.0
    %281 = vmatpush1.msra.mxu0 0.0
    %282 = vmatprep.subr.mxu0 0.0
    %283 = vmatpush1.msra.mxu0 0.0
    %284 = vmatprep.subr.mxu0 0.0
    %285 = vmatpush1.msra.mxu0 0.0
    %286 = vmatprep.subr.mxu0 0.0
    %287 = vmatpush1.msra.mxu0 0.0
    %288 = vmatprep.subr.mxu0 0.0
    %289 = vmatpush1.msra.mxu0 0.0
    %290 = vmatprep.subr.mxu0 0.0
    %291 = vmatpush1.msra.mxu0 0.0
    %292 = vmatprep.subr.mxu0 0.0
    %293 = vmatpush1.msra.mxu0 0.0
    %294 = vmatprep.subr.mxu0 0.0
    %295 = vmatpush1.msra.mxu0 0.0
    %296 = vmatprep.subr.mxu0 0.0
    %297 = vmatpush1.msra.mxu0 0.0
    %298 = vmatprep.subr.mxu0 0.0
    %299 = vmatpush1.msra.mxu0 0.0
    %300 = vmatprep.mubr.f32.mxu0 0.0
    %301 = vmatmul.mubr.f32.gmra.mrb[0].mxu0 %v234
    %v302 = vpop.f32.mrb[0].mxu0
    %v303 = vadd.f32 %v231, %v302
    %v304 = vpop.f32.mrb[0].mxu0
    %305 = vdwg.mxu0
    %vm306 = vcmask 130048
    %307 = vst.msk [vmem:[#allocation5] sm:$0xff] %vm306, %v303
    // Predicated region
    $region34: #{tpu_custom_call.1} parent=1 // pred_check
      _
    $region35: #{tpu_custom_call.1} parent=1 // pred_check_branch
      %309 = sbr.rel (0) target = $region37
    $region36: #{tpu_custom_call.1} parent=1 // pred_region
      %s311 = ssub.s32 128, 128
      %312 = vsyncadd [#allocation4], %s311
      %s314 = sshll.u32 [#allocation5], 4
      %s315 = int_to_ptr.vmem [resolvable:$true] %s314
      %317 = dma.vmem_to_hbm [thread:$0]  %s315, 128, %s7, [#allocation4]
    $region37: #{tpu_custom_call.1} parent=1 // pred_fallthru
      _
    // Predicated region
    $region38: #{tpu_custom_call.1} parent=1 // pred_check
      _
    $region39: #{tpu_custom_call.1} parent=1 // pred_check_branch
      %319 = sbr.rel (0) target = $region41
    $region40: #{tpu_custom_call.1} parent=1 // pred_region
      %320 = dma.done [#allocation4], 128
    $region41: #{tpu_custom_call.1} parent=1 // pred_fallthru
      _
    %321 = vsyncpa [#allocation3], 1
    %322 = vsyncpa [#allocation4], 1

</llo_original>
